<compile_context>
chip_gen: v6e
topology: v6e:2x2x1
jax: 0.10.0
libtpu: 0.0.40
codegen_flags: <defaults>
</compile_context>

<pallas_src>
import functools

import jax
import jax.numpy as jnp
from jax import lax
from jax.experimental import pallas as pl
from jax.experimental.pallas import tpu as pltpu

FOCAL_GAMMA = 2.0          # handled as an explicit square below
NUM_SHARDS = 2             # v7x has 2 TensorCores; harmless on 1-TC chips
MAX_ROW_TILE = 1024        # ~85% of HBM roofline per measured Pallas data
PER_BUFFER_BYTES = 8 * 1024 * 1024   # cap per double-buffered logits buffer


def _round_up(x, m):
    return ((x + m - 1) // m) * m


def _pick_row_tile(n, c):
    """Largest sublane-aligned row tile that fits the per-buffer VMEM budget."""
    by_vmem = max(8, (PER_BUFFER_BYTES // (max(c, 1) * 4)) // 8 * 8)
    return max(8, min(MAX_ROW_TILE, by_vmem, _round_up(n, 8)))


def _compound_loss_kernel(logits_ref, tgt_ref, msk_ref, out_ref,
                          ce_acc, focal_acc, msk_acc,
                          *, n_rows, row_tile, tiles_per_shard):
    """One grid step: a (row_tile, C) slab of logits + per-row target/mask.

    Grid is (num_shards, tiles_per_shard); each shard accumulates its own
    partial sums in VMEM scratch columns and writes one (8, 128) output block
    (sublane 0, lanes 0/1/2 = ce / focal / mask sums) on its last step.
    """
    shard = pl.program_id(0)
    step = pl.program_id(1)
    n_steps = pl.num_programs(1)

    @pl.when(step == 0)
    def _():
        ce_acc[...] = jnp.zeros_like(ce_acc)
        focal_acc[...] = jnp.zeros_like(focal_acc)
        msk_acc[...] = jnp.zeros_like(msk_acc)

    x = logits_ref[...].astype(jnp.float32)                   # (TR, C)
    tr, c = x.shape

    # In-kernel tail masking (no host-side padding of the inputs).  Rows whose
    # *unclamped* global index is >= n_rows (block padding or duplicate blocks
    # from the shard split) contribute exactly 0 via jnp.where selects, so any
    # garbage (inf/nan) in padded data cannot propagate.
    block_idx = shard * tiles_per_shard + step
    row_iota = lax.broadcasted_iota(jnp.int32, (tr, 1), 0)     # (TR, 1)
    valid = (block_idx * row_tile + row_iota) < n_rows         # (TR, 1) bool

    # Numerically stable log-softmax; only the target column needs m + lse.
    m = jnp.max(x, axis=-1, keepdims=True)                     # (TR, 1)
    lse = jnp.log(jnp.sum(jnp.exp(x - m), axis=-1, keepdims=True))

    # Gather the raw target logit via a (1, C) iota broadcast against (TR, 1).
    cls_iota = lax.broadcasted_iota(jnp.int32, (1, c), 1)      # (1, C)
    tgt = tgt_ref[...]                                         # (TR, 1) int32
    onehot = cls_iota == tgt                                   # (TR, C)
    x_t = jnp.sum(jnp.where(onehot, x, 0.0), axis=-1, keepdims=True)
    logp_t = x_t - m - lse                                     # (TR, 1)

    msk = msk_ref[...].astype(jnp.float32)                     # (TR, 1)

    ce = -logp_t                                               # per-token CE
    pt = jnp.exp(logp_t)                                       # prob of target
    omp = 1.0 - pt
    focal = omp * omp * ce                                     # gamma == 2.0

    # VPU-only accumulation; the reduction is deferred to the last step.
    ce_acc[...] += jnp.where(valid, ce * msk, 0.0)
    focal_acc[...] += jnp.where(valid, focal * msk, 0.0)
    msk_acc[...] += jnp.where(valid, msk, 0.0)

    @pl.when(step == n_steps - 1)
    def _():
        ce_tot = jnp.sum(ce_acc[...])
        focal_tot = jnp.sum(focal_acc[...])
        msk_tot = jnp.sum(msk_acc[...])
        sub = lax.broadcasted_iota(jnp.int32, (8, 128), 0)
        lane = lax.broadcasted_iota(jnp.int32, (8, 128), 1)
        row0 = sub == 0
        out_ref[...] = jnp.where(
            row0 & (lane == 0), ce_tot,
            jnp.where(row0 & (lane == 1), focal_tot,
                      jnp.where(row0 & (lane == 2), msk_tot, 0.0)))


@functools.partial(jax.jit, static_argnames=("row_tile", "num_shards"))
def _masked_loss_sums(logits_2d, targets_2d, mask_2d, *, row_tile, num_shards):
    n, c = logits_2d.shape
    nblocks = pl.cdiv(n, row_tile)
    tiles_per_shard = pl.cdiv(nblocks, num_shards)
    grid = (num_shards, tiles_per_shard)

    kernel = functools.partial(
        _compound_loss_kernel,
        n_rows=n, row_tile=row_tile, tiles_per_shard=tiles_per_shard)

    def in_map(s, i):
        # Clamp so duplicate tiles from the shard split never index past the
        # last real block; their rows are zeroed in-kernel via `valid`.
        return (jnp.minimum(s * tiles_per_shard + i, nblocks - 1), 0)

    out = pl.pallas_call(
        kernel,
        out_shape=jax.ShapeDtypeStruct((num_shards * 8, 128), jnp.float32),
        grid_spec=pltpu.PrefetchScalarGridSpec(
            num_scalar_prefetch=0,
            grid=grid,
            in_specs=[
                pl.BlockSpec((row_tile, c), in_map),
                pl.BlockSpec((row_tile, 1), in_map),
                pl.BlockSpec((row_tile, 1), in_map),
            ],
            out_specs=pl.BlockSpec((8, 128), lambda s, i: (s, 0)),
            scratch_shapes=[pltpu.VMEM((row_tile, 1), jnp.float32)] * 3,
        ),
        compiler_params=pltpu.CompilerParams(
            dimension_semantics=("parallel", "arbitrary"),
            vmem_limit_bytes=32 * 1024 * 1024),
        cost_estimate=pl.CostEstimate(
            flops=6 * n * c,
            transcendentals=n * c,
            bytes_accessed=n * c * 4 + 2 * n * 4 + num_shards * 8 * 128 * 4),
    )(logits_2d, targets_2d, mask_2d)

    totals = jnp.sum(out, axis=0)          # all non-result slots are zero
    return totals[0], totals[1], totals[2]


def compound_loss(inputs, targets, mask=None, weights=None):
    """JAX/Pallas equivalent of CompoundLoss.forward.

    Args:
      inputs:  (B, S, C) float logits
      targets: (B, S)    int labels
      mask:    (B, S)    optional float/bool padding mask
      weights: dict of per-loss weights
    Returns:
      (total_loss, losses_dict).  losses_dict holds device scalars (callers
      that need Python floats can .item()/float() them; doing it here would
      force a device->host sync per loss every step).
    """
    if weights is None:
        weights = {"cross_entropy": 1.0, "focal": 0.5}

    b, s, c = inputs.shape
    n = b * s
    logits_2d = inputs.reshape(n, c).astype(jnp.float32)
    targets_2d = targets.reshape(n, 1).astype(jnp.int32)
    if mask is None:
        mask_2d = jnp.ones((n, 1), jnp.float32)
    else:
        mask_2d = mask.reshape(n, 1).astype(jnp.float32)

    row_tile = _pick_row_tile(n, c)
    ce_sum, focal_sum, msk_sum = _masked_loss_sums(
        logits_2d, targets_2d, mask_2d,
        row_tile=row_tile, num_shards=NUM_SHARDS)

    denom = jnp.maximum(msk_sum, 1.0)
    losses = {"cross_entropy": ce_sum / denom, "focal": focal_sum / denom}

    total = jnp.float32(0.0)
    losses_dict = {}
    for name, val in losses.items():
        total = total + weights[name] * val
        losses_dict[name] = val            # device scalar (no host sync here)
    return total, losses_dict


def _reference(inputs, targets, mask, weights):
    """Pure-JAX reference for a sanity check."""
    logp = jax.nn.log_softmax(inputs.astype(jnp.float32), axis=-1)
    logp_t = jnp.take_along_axis(logp, targets[..., None], axis=-1)[..., 0]
    if mask is None:
        m = jnp.ones(targets.shape, jnp.float32)
    else:
        m = mask.astype(jnp.float32)
    denom = jnp.maximum(m.sum(), 1.0)
    ce = jnp.sum(-logp_t * m) / denom
    pt = jnp.exp(logp_t)
    focal = jnp.sum(((1.0 - pt) ** 2) * (-logp_t) * m) / denom
    return weights["cross_entropy"] * ce + weights["focal"] * focal


if __name__ == "__main__":
    key = jax.random.PRNGKey(0)
    weights = {"cross_entropy": 1.0, "focal": 0.5}

    # Case 1: (B, S, C) = (2, 8, 16) with a padding mask.
    B, S, C = 2, 8, 16
    k1, k2, k3 = jax.random.split(key, 3)
    inputs = jax.random.normal(k1, (B, S, C), dtype=jnp.float32)
    targets = jax.random.randint(k2, (B, S), 0, C, dtype=jnp.int32)
    mask = (jax.random.uniform(k3, (B, S)) > 0.25).astype(jnp.float32)

    total, losses_dict = compound_loss(inputs, targets, mask, weights)
    total = jax.block_until_ready(total)
    ref = _reference(inputs, targets, mask, weights)
    assert abs(float(total) - float(ref)) < 1e-4, (float(total), float(ref))

    # Case 2: uneven N (exercises in-kernel tail masking), no mask.
    B2, S2, C2 = 3, 7, 5
    k4, k5 = jax.random.split(k3, 2)
    inputs2 = jax.random.normal(k4, (B2, S2, C2), dtype=jnp.float32)
    targets2 = jax.random.randint(k5, (B2, S2), 0, C2, dtype=jnp.int32)

    total2, _ = compound_loss(inputs2, targets2, None, weights)
    total2 = jax.block_until_ready(total2)
    ref2 = _reference(inputs2, targets2, None, weights)
    assert abs(float(total2) - float(ref2)) < 1e-4, (float(total2), float(ref2))

    print("KERNEL_OK")
</pallas_src>

<mosaic_0001>
module attributes {stable_mosaic.version = 11 : i64} {
  func.func @_compound_loss_kernel(%arg0: i32, %arg1: i32, %arg2: memref<16x16xf32, #tpu.memory_space<vmem>>, %arg3: memref<16x1xi32, #tpu.memory_space<vmem>>, %arg4: memref<16x1xf32, #tpu.memory_space<vmem>>, %arg5: memref<8x128xf32, #tpu.memory_space<vmem>>, %arg6: memref<16x1xf32, #tpu.memory_space<vmem>>, %arg7: memref<16x1xf32, #tpu.memory_space<vmem>>, %arg8: memref<16x1xf32, #tpu.memory_space<vmem>>) attributes {dimension_semantics = [#tpu.dimension_semantics<parallel>, #tpu.dimension_semantics<arbitrary>], iteration_bounds = array<i64: 2, 1>, scalar_prefetch = 0 : i64, scratch_operands = 3 : i64, tpu.core_type = #tpu.core_type<tc>, window_params = [{transform_indices = @transform_0, window_bounds = array<i64: 16, 16>}, {transform_indices = @transform_1, window_bounds = array<i64: 16, 1>}, {transform_indices = @transform_2, window_bounds = array<i64: 16, 1>}, {transform_indices = @transform_3, window_bounds = array<i64: 8, 128>}]} {
    %c0_i32 = arith.constant 0 : i32
    %0 = arith.cmpi eq, %arg1, %c0_i32 : i32
    %1 = arith.extui %0 : i1 to i32
    %c0_i32_0 = arith.constant 0 : i32
    %2 = arith.cmpi ne, %1, %c0_i32_0 : i32
    scf.if %2 {
      %cst_29 = arith.constant 0.000000e+00 : f32
      %59 = vector.broadcast %cst_29 : f32 to vector<16x1xf32>
      %c0_30 = arith.constant 0 : index
      %c0_31 = arith.constant 0 : index
      %60 = vector.load %arg6[%c0_30, %c0_31] : memref<16x1xf32, #tpu.memory_space<vmem>>, vector<16x1xf32>
      tpu.vector_store %arg6[%c0_30, %c0_31], %59 {strides = array<i32>} : memref<16x1xf32, #tpu.memory_space<vmem>>, vector<16x1xf32>,
      %cst_32 = arith.constant 0.000000e+00 : f32
      %61 = vector.broadcast %cst_32 : f32 to vector<16x1xf32>
      %c0_33 = arith.constant 0 : index
      %c0_34 = arith.constant 0 : index
      %62 = vector.load %arg7[%c0_33, %c0_34] : memref<16x1xf32, #tpu.memory_space<vmem>>, vector<16x1xf32>
      tpu.vector_store %arg7[%c0_33, %c0_34], %61 {strides = array<i32>} : memref<16x1xf32, #tpu.memory_space<vmem>>, vector<16x1xf32>,
      %cst_35 = arith.constant 0.000000e+00 : f32
      %63 = vector.broadcast %cst_35 : f32 to vector<16x1xf32>
      %c0_36 = arith.constant 0 : index
      %c0_37 = arith.constant 0 : index
      %64 = vector.load %arg8[%c0_36, %c0_37] : memref<16x1xf32, #tpu.memory_space<vmem>>, vector<16x1xf32>
      tpu.vector_store %arg8[%c0_36, %c0_37], %63 {strides = array<i32>} : memref<16x1xf32, #tpu.memory_space<vmem>>, vector<16x1xf32>,
    } else {
    }
    %c0 = arith.constant 0 : index
    %c0_1 = arith.constant 0 : index
    %3 = vector.load %arg2[%c0, %c0_1] : memref<16x16xf32, #tpu.memory_space<vmem>>, vector<16x16xf32>
    %c1_i32 = arith.constant 1 : i32
    %4 = arith.muli %arg0, %c1_i32 : i32
    %5 = arith.addi %4, %arg1 : i32
    %6 = tpu.iota {dimensions = array<i32: 0>} : vector<16x1xi32>
    %c16_i32 = arith.constant 16 : i32
    %7 = arith.muli %5, %c16_i32 : i32
    %8 = vector.broadcast %7 : i32 to vector<16x1xi32>
    %9 = arith.addi %8, %6 : vector<16x1xi32>
    %c16_i32_2 = arith.constant 16 : i32
    %10 = vector.broadcast %c16_i32_2 : i32 to vector<16x1xi32>
    %11 = arith.cmpi slt, %9, %10 : vector<16x1xi32>
    %cst = arith.constant dense<0xFF800000> : vector<16xf32>
    %12 = vector.multi_reduction <maximumf>, %3, %cst [1] : vector<16x16xf32> to vector<16xf32>
    %13 = vector.shape_cast %12 : vector<16xf32> to vector<16x1xf32>
    %14 = vector.broadcast %13 : vector<16x1xf32> to vector<16x16xf32>
    %15 = arith.subf %3, %14 : vector<16x16xf32>
    %16 = math.exp %15 : vector<16x16xf32>
    %cst_3 = arith.constant dense<0.000000e+00> : vector<16xf32>
    %17 = vector.multi_reduction <add>, %16, %cst_3 [1] : vector<16x16xf32> to vector<16xf32>
    %18 = vector.shape_cast %17 : vector<16xf32> to vector<16x1xf32>
    %19 = math.log %18 : vector<16x1xf32>
    %20 = tpu.iota {dimensions = array<i32: 1>} : vector<1x16xi32>
    %c0_4 = arith.constant 0 : index
    %c0_5 = arith.constant 0 : index
    %21 = vector.load %arg3[%c0_4, %c0_5] : memref<16x1xi32, #tpu.memory_space<vmem>>, vector<16x1xi32>
    %22 = vector.broadcast %20 : vector<1x16xi32> to vector<16x16xi32>
    %23 = vector.broadcast %21 : vector<16x1xi32> to vector<16x16xi32>
    %24 = arith.cmpi eq, %22, %23 : vector<16x16xi32>
    %cst_6 = arith.constant 0.000000e+00 : f32
    %25 = vector.broadcast %cst_6 : f32 to vector<16x16xf32>
    %26 = arith.select %24, %3, %25 : vector<16x16xi1>, vector<16x16xf32>
    %cst_7 = arith.constant dense<0.000000e+00> : vector<16xf32>
    %27 = vector.multi_reduction <add>, %26, %cst_7 [1] : vector<16x16xf32> to vector<16xf32>
    %28 = vector.shape_cast %27 : vector<16xf32> to vector<16x1xf32>
    %29 = arith.subf %28, %13 : vector<16x1xf32>
    %30 = arith.subf %29, %19 : vector<16x1xf32>
    %c0_8 = arith.constant 0 : index
    %c0_9 = arith.constant 0 : index
    %31 = vector.load %arg4[%c0_8, %c0_9] : memref<16x1xf32, #tpu.memory_space<vmem>>, vector<16x1xf32>
    %cst_10 = arith.constant 0.000000e+00 : f32
    %32 = vector.broadcast %cst_10 : f32 to vector<16x1xf32>
    %33 = arith.subf %32, %30 : vector<16x1xf32>
    %34 = math.exp %30 : vector<16x1xf32>
    %cst_11 = arith.constant 1.000000e+00 : f32
    %35 = vector.broadcast %cst_11 : f32 to vector<16x1xf32>
    %36 = arith.subf %35, %34 : vector<16x1xf32>
    %37 = arith.mulf %36, %36 : vector<16x1xf32>
    %38 = arith.mulf %37, %33 : vector<16x1xf32>
    %c0_12 = arith.constant 0 : index
    %c0_13 = arith.constant 0 : index
    %39 = vector.load %arg6[%c0_12, %c0_13] : memref<16x1xf32, #tpu.memory_space<vmem>>, vector<16x1xf32>
    %40 = arith.mulf %33, %31 : vector<16x1xf32>
    %cst_14 = arith.constant 0.000000e+00 : f32
    %41 = vector.broadcast %cst_14 : f32 to vector<16x1xf32>
    %42 = arith.select %11, %40, %41 : vector<16x1xi1>, vector<16x1xf32>
    %43 = arith.addf %39, %42 : vector<16x1xf32>
    %c0_15 = arith.constant 0 : index
    %c0_16 = arith.constant 0 : index
    %44 = vector.load %arg6[%c0_15, %c0_16] : memref<16x1xf32, #tpu.memory_space<vmem>>, vector<16x1xf32>
    tpu.vector_store %arg6[%c0_15, %c0_16], %43 {strides = array<i32>} : memref<16x1xf32, #tpu.memory_space<vmem>>, vector<16x1xf32>,
    %c0_17 = arith.constant 0 : index
    %c0_18 = arith.constant 0 : index
    %45 = vector.load %arg7[%c0_17, %c0_18] : memref<16x1xf32, #tpu.memory_space<vmem>>, vector<16x1xf32>
    %46 = arith.mulf %38, %31 : vector<16x1xf32>
    %cst_19 = arith.constant 0.000000e+00 : f32
    %47 = vector.broadcast %cst_19 : f32 to vector<16x1xf32>
    %48 = arith.select %11, %46, %47 : vector<16x1xi1>, vector<16x1xf32>
    %49 = arith.addf %45, %48 : vector<16x1xf32>
    %c0_20 = arith.constant 0 : index
    %c0_21 = arith.constant 0 : index
    %50 = vector.load %arg7[%c0_20, %c0_21] : memref<16x1xf32, #tpu.memory_space<vmem>>, vector<16x1xf32>
    tpu.vector_store %arg7[%c0_20, %c0_21], %49 {strides = array<i32>} : memref<16x1xf32, #tpu.memory_space<vmem>>, vector<16x1xf32>,
    %c0_22 = arith.constant 0 : index
    %c0_23 = arith.constant 0 : index
    %51 = vector.load %arg8[%c0_22, %c0_23] : memref<16x1xf32, #tpu.memory_space<vmem>>, vector<16x1xf32>
    %cst_24 = arith.constant 0.000000e+00 : f32
    %52 = vector.broadcast %cst_24 : f32 to vector<16x1xf32>
    %53 = arith.select %11, %31, %52 : vector<16x1xi1>, vector<16x1xf32>
    %54 = arith.addf %51, %53 : vector<16x1xf32>
    %c0_25 = arith.constant 0 : index
    %c0_26 = arith.constant 0 : index
    %55 = vector.load %arg8[%c0_25, %c0_26] : memref<16x1xf32, #tpu.memory_space<vmem>>, vector<16x1xf32>
    tpu.vector_store %arg8[%c0_25, %c0_26], %54 {strides = array<i32>} : memref<16x1xf32, #tpu.memory_space<vmem>>, vector<16x1xf32>,
    %c0_i32_27 = arith.constant 0 : i32
    %56 = arith.cmpi eq, %arg1, %c0_i32_27 : i32
    %57 = arith.extui %56 : i1 to i32
    %c0_i32_28 = arith.constant 0 : i32
    %58 = arith.cmpi ne, %57, %c0_i32_28 : i32
    scf.if %58 {
      %c0_29 = arith.constant 0 : index
      %c0_30 = arith.constant 0 : index
      %59 = vector.load %arg6[%c0_29, %c0_30] : memref<16x1xf32, #tpu.memory_space<vmem>>, vector<16x1xf32>
      %60 = vector.shape_cast %59 : vector<16x1xf32> to vector<1x16x1xf32>
      %cst_31 = arith.constant dense<0.000000e+00> : vector<1xf32>
      %61 = vector.multi_reduction <add>, %60, %cst_31 [1, 2] : vector<1x16x1xf32> to vector<1xf32>
      %62 = vector.shape_cast %61 : vector<1xf32> to vector<1x1x1xf32>
      %63 = vector.extract %62[0, 0, 0] : f32 from vector<1x1x1xf32>
      %c0_32 = arith.constant 0 : index
      %c0_33 = arith.constant 0 : index
      %64 = vector.load %arg7[%c0_32, %c0_33] : memref<16x1xf32, #tpu.memory_space<vmem>>, vector<16x1xf32>
      %65 = vector.shape_cast %64 : vector<16x1xf32> to vector<1x16x1xf32>
      %cst_34 = arith.constant dense<0.000000e+00> : vector<1xf32>
      %66 = vector.multi_reduction <add>, %65, %cst_34 [1, 2] : vector<1x16x1xf32> to vector<1xf32>
      %67 = vector.shape_cast %66 : vector<1xf32> to vector<1x1x1xf32>
      %68 = vector.extract %67[0, 0, 0] : f32 from vector<1x1x1xf32>
      %c0_35 = arith.constant 0 : index
      %c0_36 = arith.constant 0 : index
      %69 = vector.load %arg8[%c0_35, %c0_36] : memref<16x1xf32, #tpu.memory_space<vmem>>, vector<16x1xf32>
      %70 = vector.shape_cast %69 : vector<16x1xf32> to vector<1x16x1xf32>
      %cst_37 = arith.constant dense<0.000000e+00> : vector<1xf32>
      %71 = vector.multi_reduction <add>, %70, %cst_37 [1, 2] : vector<1x16x1xf32> to vector<1xf32>
      %72 = vector.shape_cast %71 : vector<1xf32> to vector<1x1x1xf32>
      %73 = vector.extract %72[0, 0, 0] : f32 from vector<1x1x1xf32>
      %74 = tpu.iota {dimensions = array<i32: 0>} : vector<8x128xi32>
      %75 = tpu.iota {dimensions = array<i32: 1>} : vector<8x128xi32>
      %c0_i32_38 = arith.constant 0 : i32
      %76 = vector.broadcast %c0_i32_38 : i32 to vector<8x128xi32>
      %77 = arith.cmpi eq, %74, %76 : vector<8x128xi32>
      %c0_i32_39 = arith.constant 0 : i32
      %78 = vector.broadcast %c0_i32_39 : i32 to vector<8x128xi32>
      %79 = arith.cmpi eq, %75, %78 : vector<8x128xi32>
      %80 = arith.andi %77, %79 : vector<8x128xi1>
      %c1_i32_40 = arith.constant 1 : i32
      %81 = vector.broadcast %c1_i32_40 : i32 to vector<8x128xi32>
      %82 = arith.cmpi eq, %75, %81 : vector<8x128xi32>
      %83 = arith.andi %77, %82 : vector<8x128xi1>
      %c2_i32 = arith.constant 2 : i32
      %84 = vector.broadcast %c2_i32 : i32 to vector<8x128xi32>
      %85 = arith.cmpi eq, %75, %84 : vector<8x128xi32>
      %86 = arith.andi %77, %85 : vector<8x128xi1>
      %cst_41 = arith.constant 0.000000e+00 : f32
      %87 = vector.broadcast %73 : f32 to vector<8x128xf32>
      %88 = vector.broadcast %cst_41 : f32 to vector<8x128xf32>
      %89 = arith.select %86, %87, %88 : vector<8x128xi1>, vector<8x128xf32>
      %90 = vector.broadcast %68 : f32 to vector<8x128xf32>
      %91 = arith.select %83, %90, %89 : vector<8x128xi1>, vector<8x128xf32>
      %92 = vector.broadcast %63 : f32 to vector<8x128xf32>
      %93 = arith.select %80, %92, %91 : vector<8x128xi1>, vector<8x128xf32>
      %c0_42 = arith.constant 0 : index
      %c0_43 = arith.constant 0 : index
      %94 = vector.load %arg5[%c0_42, %c0_43] : memref<8x128xf32, #tpu.memory_space<vmem>>, vector<8x128xf32>
      tpu.vector_store %arg5[%c0_42, %c0_43], %93 {strides = array<i32>} : memref<8x128xf32, #tpu.memory_space<vmem>>, vector<8x128xf32>,
    } else {
    }
    return
  }
  func.func @transform_0(%arg0: i32, %arg1: i32) -> (i32, i32) {
    %c1_i32 = arith.constant 1 : i32
    %0 = arith.muli %arg0, %c1_i32 : i32
    %1 = arith.addi %0, %arg1 : i32
    %c0_i32 = arith.constant 0 : i32
    %2 = arith.minsi %1, %c0_i32 : i32
    %c0_i32_0 = arith.constant 0 : i32
    %c0_i32_1 = arith.constant 0 : i32
    return %2, %c0_i32_0 : i32, i32
  }
  func.func @transform_1(%arg0: i32, %arg1: i32) -> (i32, i32) {
    %c1_i32 = arith.constant 1 : i32
    %0 = arith.muli %arg0, %c1_i32 : i32
    %1 = arith.addi %0, %arg1 : i32
    %c0_i32 = arith.constant 0 : i32
    %2 = arith.minsi %1, %c0_i32 : i32
    %c0_i32_0 = arith.constant 0 : i32
    %c0_i32_1 = arith.constant 0 : i32
    return %2, %c0_i32_0 : i32, i32
  }
  func.func @transform_2(%arg0: i32, %arg1: i32) -> (i32, i32) {
    %c1_i32 = arith.constant 1 : i32
    %0 = arith.muli %arg0, %c1_i32 : i32
    %1 = arith.addi %0, %arg1 : i32
    %c0_i32 = arith.constant 0 : i32
    %2 = arith.minsi %1, %c0_i32 : i32
    %c0_i32_0 = arith.constant 0 : i32
    %c0_i32_1 = arith.constant 0 : i32
    return %2, %c0_i32_0 : i32, i32
  }
  func.func @transform_3(%arg0: i32, %arg1: i32) -> (i32, i32) {
    %c0_i32 = arith.constant 0 : i32
    %c0_i32_0 = arith.constant 0 : i32
    return %arg0, %c0_i32 : i32, i32
  }
}

</mosaic_0001>

<llo_original>
// kernel: _masked_loss_sums.1
$region0: #{_masked_loss_sums.1}
  #allocation0 [shape = 'u32[]', space=smem, size = 0x4, offset = 0x4, fixed_abs, tag = 'smem constant byte address 0x4 - core index']
  #allocation1 [shape = 'u32[144,128]{1,0:T(1,128)}', space=vmem, size = 0x12000, scoped, tag = 'internal scratch']
  #allocation2 [shape = 'f32[16,1]{1,0:T(8,128)}', space=vmem, size = 0x2000, scoped, tag = 'scratch operand']
  #allocation3 [shape = 'f32[16,1]{1,0:T(8,128)}', space=vmem, size = 0x2000, scoped, tag = 'scratch operand']
  #allocation4 [shape = 'f32[16,1]{1,0:T(8,128)}', space=vmem, size = 0x2000, scoped, tag = 'scratch operand']
  %s0 = inlined_call_operand.vmem [shape: f32[16,16], index: 0, kind: input, shape index: {}]
  %s1 = inlined_call_operand.vmem [shape: s32[16,1], index: 1, kind: input, shape index: {}]
  %s2 = inlined_call_operand.vmem [shape: f32[16,1], index: 2, kind: input, shape index: {}]
  %s3 = inlined_call_operand.vmem [shape: f32[16,128], index: 3, kind: output, shape index: {}]
  %s4 = sld [smem:[#allocation0]]
  $region53: #{_masked_loss_sums.1} parent=0
    _
  %s6 = ssub.s32 1, %s4
  %s7 = scalar_select 0, %s6, %s4
  loop: start=0, step=1, limit=4
  $region2: #{_masked_loss_sums.1} parent=0 // loop_pre_header
    _
  $region3: #{_masked_loss_sums.1} parent=0 // loop_header
    %s9 = sphi 0, %s13
    %p10 = scmp.ge.s32.totalorder %s9, 4
    %s16 = sphi 0, %s28
    %s17 = sphi 0, %s24
    %s18 = sphi 0, %s16
    %s19 = sphi 0, %s17
    %s20 = sphi 0, %s18
    %s21 = sphi 0, %s19
    %s37 = sphi 0, %s39
    %s40 = sphi 0, %s37
    %s41 = sphi 0, %s40
    %s57 = sphi 0, %s41
    %s69 = sphi 0, %s71
    %s72 = sphi 0, %s69
    %s73 = sphi 0, %s72
    %s89 = sphi 0, %s73
    %s101 = sphi 0, %s103
    %s104 = sphi 0, %s101
    %s105 = sphi 0, %s104
    %s121 = sphi 0, %s105
    %s127 = sphi 0, %s129
    %s130 = sphi 0, %s127
    %s131 = sphi 0, %s130
    %s147 = sphi 0, %s131
  $region4: #{_masked_loss_sums.1} parent=0 // loop_header_branch
    %12 = sbr.rel (%p10) target = $region8
  $region5: #{_masked_loss_sums.1} parent=0 // loop_body
    %s14 = ssub.s32 %s9, 1
    %s15 = ssub.s32 %s9, 2
    %s22 = sadd.s32 1, %s17
    %p23 = scmp.ge.s32.totalorder %s22, 1
    %s24 = scalar_select %p23, 0, %s22
    %s25 = sadd.s32 1, %s16
    %s26 = scalar_select %p23, %s25, %s16
    %p27 = scmp.ge.s32.totalorder %s26, 2
    %s28 = scalar_select %p27, 0, %s26
    %s29 = sadd.s32 %s16, %s17
    %p30 = scmp.lt.s32.totalorder %s29, 0
    %s31 = scalar_select %p30, %s29, 0
    %s32 = sadd.s32 %s28, %s24
    %p33 = scmp.lt.s32.totalorder %s32, 0
    %s34 = scalar_select %p33, %s32, 0
    %s35 = ssub.s32 %s31, %s34
    %p36 = scmp.eq.s32.totalorder %s35, 0
    %s38 = sadd.s32 %s37, 1
    %s39 = scalar_select %p36, %s37, %s38
    %p42 = pneg %p36
    %p43 = scmp.eq.s32.totalorder %s9, 1
    %p44 = por %p42, %p43
    %p45 = scmp.ne.s32.totalorder %s37, %s40
    %p46 = scmp.eq.s32.totalorder %s9, 0
    %p47 = por %p45, %p46
    %p48 = scmp.ne.s32.totalorder %s37, %s40
    %p49 = scmp.eq.s32.totalorder %s14, 1
    %p50 = por %p48, %p49
    %p51 = scmp.ne.s32.totalorder %s40, %s41
    %p52 = scmp.eq.s32.totalorder %s14, 0
    %p53 = por %p51, %p52
    %p54 = scmp.ne.s32.totalorder %s40, %s41
    %p55 = scmp.eq.s32.totalorder %s15, 1
    %p56 = por %p54, %p55
    %p58 = scmp.ne.s32.totalorder %s41, %s57
    %p59 = scmp.eq.s32.totalorder %s15, 0
    %p60 = por %p58, %p59
    %s61 = sadd.s32 %s16, %s17
    %p62 = scmp.lt.s32.totalorder %s61, 0
    %s63 = scalar_select %p62, %s61, 0
    %s64 = sadd.s32 %s28, %s24
    %p65 = scmp.lt.s32.totalorder %s64, 0
    %s66 = scalar_select %p65, %s64, 0
    %s67 = ssub.s32 %s63, %s66
    %p68 = scmp.eq.s32.totalorder %s67, 0
    %s70 = sadd.s32 %s69, 1
    %s71 = scalar_select %p68, %s69, %s70
    %p74 = pneg %p68
    %p75 = scmp.eq.s32.totalorder %s9, 1
    %p76 = por %p74, %p75
    %p77 = scmp.ne.s32.totalorder %s69, %s72
    %p78 = scmp.eq.s32.totalorder %s9, 0
    %p79 = por %p77, %p78
    %p80 = scmp.ne.s32.totalorder %s69, %s72
    %p81 = scmp.eq.s32.totalorder %s14, 1
    %p82 = por %p80, %p81
    %p83 = scmp.ne.s32.totalorder %s72, %s73
    %p84 = scmp.eq.s32.totalorder %s14, 0
    %p85 = por %p83, %p84
    %p86 = scmp.ne.s32.totalorder %s72, %s73
    %p87 = scmp.eq.s32.totalorder %s15, 1
    %p88 = por %p86, %p87
    %p90 = scmp.ne.s32.totalorder %s73, %s89
    %p91 = scmp.eq.s32.totalorder %s15, 0
    %p92 = por %p90, %p91
    %s93 = sadd.s32 %s16, %s17
    %p94 = scmp.lt.s32.totalorder %s93, 0
    %s95 = scalar_select %p94, %s93, 0
    %s96 = sadd.s32 %s28, %s24
    %p97 = scmp.lt.s32.totalorder %s96, 0
    %s98 = scalar_select %p97, %s96, 0
    %s99 = ssub.s32 %s95, %s98
    %p100 = scmp.eq.s32.totalorder %s99, 0
    %s102 = sadd.s32 %s101, 1
    %s103 = scalar_select %p100, %s101, %s102
    %p106 = pneg %p100
    %p107 = scmp.eq.s32.totalorder %s9, 1
    %p108 = por %p106, %p107
    %p109 = scmp.ne.s32.totalorder %s101, %s104
    %p110 = scmp.eq.s32.totalorder %s9, 0
    %p111 = por %p109, %p110
    %p112 = scmp.ne.s32.totalorder %s101, %s104
    %p113 = scmp.eq.s32.totalorder %s14, 1
    %p114 = por %p112, %p113
    %p115 = scmp.ne.s32.totalorder %s104, %s105
    %p116 = scmp.eq.s32.totalorder %s14, 0
    %p117 = por %p115, %p116
    %p118 = scmp.ne.s32.totalorder %s104, %s105
    %p119 = scmp.eq.s32.totalorder %s15, 1
    %p120 = por %p118, %p119
    %p122 = scmp.ne.s32.totalorder %s105, %s121
    %p123 = scmp.eq.s32.totalorder %s15, 0
    %p124 = por %p122, %p123
    %s125 = ssub.s32 %s16, %s28
    %p126 = scmp.eq.s32.totalorder %s125, 0
    %s128 = sadd.s32 %s127, 1
    %s129 = scalar_select %p126, %s127, %s128
    %p132 = pneg %p126
    %p133 = scmp.eq.s32.totalorder %s9, 1
    %p134 = por %p132, %p133
    %p135 = scmp.ne.s32.totalorder %s127, %s130
    %p136 = scmp.eq.s32.totalorder %s9, 0
    %p137 = por %p135, %p136
    %p138 = scmp.ne.s32.totalorder %s127, %s130
    %p139 = scmp.eq.s32.totalorder %s14, 1
    %p140 = por %p138, %p139
    %p141 = scmp.ne.s32.totalorder %s130, %s131
    %p142 = scmp.eq.s32.totalorder %s14, 0
    %p143 = por %p141, %p142
    %p144 = scmp.ne.s32.totalorder %s130, %s131
    %p145 = scmp.eq.s32.totalorder %s15, 1
    %p146 = por %p144, %p145
    %p148 = scmp.ne.s32.totalorder %s131, %s147
    %p149 = scmp.eq.s32.totalorder %s15, 0
    %p150 = por %p148, %p149
    %p151 = scmp.le.s32.totalorder 1, %s9
    %p152 = scmp.lt.s32.totalorder %s9, 3
    %p153 = pnand %p151, %p152
    %p154 = pneg %p153
    // Predicated region
    $region9: #{_masked_loss_sums.1} parent=5 // pred_check
      _
    $region10: #{_masked_loss_sums.1} parent=5 // pred_check_branch
      %156 = sbr.rel (%p153) target = $region12
    $region11: #{_masked_loss_sums.1} parent=5 // pred_region
      %s157 = ssub.s32 %s9, 1
    $region12: #{_masked_loss_sums.1} parent=5 // pred_fallthru
      _
    %p158 = scmp.lt.s32.totalorder %s9, 2
    // Predicated region
    $region13: #{_masked_loss_sums.1} parent=5 // pred_check
      %p159 = pneg %p158
    $region14: #{_masked_loss_sums.1} parent=5 // pred_check_branch
      %161 = sbr.rel (%p159) target = $region16
    $region15: #{_masked_loss_sums.1} parent=5 // pred_region
      // Predicated region
      $region17: #{_masked_loss_sums.1} parent=15 // pred_check
        %p162 = pneg %p47
      $region18: #{_masked_loss_sums.1} parent=15 // pred_check_branch
        %164 = sbr.rel (%p162) target = $region20
      $region19: #{_masked_loss_sums.1} parent=15 // pred_region
        %s165 = sadd.s32 %s16, %s17
        %p166 = scmp.lt.s32.totalorder %s165, 0
        %s167 = scalar_select %p166, %s165, 0
        %s168 = smul.u32 2, %s167
        %p169 = scmp.lt.s32.totalorder %s168, 1
        %s170 = scalar_select %p169, %s168, 1
        %s171 = smul.addr %s170, 8
        %s172 = scalar_lea.vmem %s0, %s171
        %s173 = sadd.s32 %s16, %s17
        %p174 = scmp.lt.s32.totalorder %s173, 0
        %s175 = scalar_select %p174, %s173, 0
        %s176 = smul.u32 2, %s175
      $region20: #{_masked_loss_sums.1} parent=15 // pred_fallthru
        _
      // Predicated region
      $region21: #{_masked_loss_sums.1} parent=15 // pred_check
        %p177 = pneg %p79
      $region22: #{_masked_loss_sums.1} parent=15 // pred_check_branch
        %179 = sbr.rel (%p177) target = $region24
      $region23: #{_masked_loss_sums.1} parent=15 // pred_region
        %s180 = sadd.s32 %s16, %s17
        %p181 = scmp.lt.s32.totalorder %s180, 0
        %s182 = scalar_select %p181, %s180, 0
        %s183 = smul.u32 2, %s182
        %p184 = scmp.lt.s32.totalorder %s183, 1
        %s185 = scalar_select %p184, %s183, 1
        %s186 = smul.addr %s185, 8
        %s187 = scalar_lea.vmem %s1, %s186
        %s188 = sadd.s32 %s16, %s17
        %p189 = scmp.lt.s32.totalorder %s188, 0
        %s190 = scalar_select %p189, %s188, 0
        %s191 = smul.u32 2, %s190
      $region24: #{_masked_loss_sums.1} parent=15 // pred_fallthru
        _
      // Predicated region
      $region25: #{_masked_loss_sums.1} parent=15 // pred_check
        %p192 = pneg %p111
      $region26: #{_masked_loss_sums.1} parent=15 // pred_check_branch
        %194 = sbr.rel (%p192) target = $region28
      $region27: #{_masked_loss_sums.1} parent=15 // pred_region
        %s195 = sadd.s32 %s16, %s17
        %p196 = scmp.lt.s32.totalorder %s195, 0
        %s197 = scalar_select %p196, %s195, 0
        %s198 = smul.u32 2, %s197
        %p199 = scmp.lt.s32.totalorder %s198, 1
        %s200 = scalar_select %p199, %s198, 1
        %s201 = smul.addr %s200, 8
        %s202 = scalar_lea.vmem %s2, %s201
        %s203 = sadd.s32 %s16, %s17
        %p204 = scmp.lt.s32.totalorder %s203, 0
        %s205 = scalar_select %p204, %s203, 0
        %s206 = smul.u32 2, %s205
      $region28: #{_masked_loss_sums.1} parent=15 // pred_fallthru
        _
    $region16: #{_masked_loss_sums.1} parent=5 // pred_fallthru
      _
    %p207 = scmp.le.s32.totalorder 1, %s9
    %p208 = scmp.lt.s32.totalorder %s9, 3
    %p209 = pnand %p207, %p208
    %p210 = pneg %p209
    // Predicated region
    $region29: #{_masked_loss_sums.1} parent=5 // pred_check
      _
    $region30: #{_masked_loss_sums.1} parent=5 // pred_check_branch
      %212 = sbr.rel (%p209) target = $region32
    $region31: #{_masked_loss_sums.1} parent=5 // pred_region
      %s213 = ssub.s32 %s9, 1
      %s214 = sadd.s32 %s18, %s19
      %p215 = scmp.lt.s32.totalorder %s214, 0
      %s216 = scalar_select %p215, %s214, 0
      %s217 = smul.u32 2, %s216
      %p218 = scmp.lt.s32.totalorder %s217, 1
      %s219 = scalar_select %p218, %s217, 1
      %s220 = smul.addr %s219, 8
      %s221 = scalar_lea.vmem %s0, %s220
      %p222 = pneg %p53
      %p223 = pneg %p50
      %s224 = sadd.s32 %s18, %s19
      %p225 = scmp.lt.s32.totalorder %s224, 0
      %s226 = scalar_select %p225, %s224, 0
      %s227 = smul.u32 2, %s226
      %p228 = scmp.lt.s32.totalorder %s227, 1
      %s229 = scalar_select %p228, %s227, 1
      %s230 = smul.addr %s229, 8
      %s231 = scalar_lea.vmem %s1, %s230
      %p232 = pneg %p85
      %p233 = pneg %p82
      %s234 = sadd.s32 %s18, %s19
      %p235 = scmp.lt.s32.totalorder %s234, 0
      %s236 = scalar_select %p235, %s234, 0
      %s237 = smul.u32 2, %s236
      %p238 = scmp.lt.s32.totalorder %s237, 1
      %s239 = scalar_select %p238, %s237, 1
      %s240 = smul.addr %s239, 8
      %s241 = scalar_lea.vmem %s2, %s240
      %p242 = pneg %p117
      %p243 = pneg %p114
      %p244 = pneg %p143
      %p245 = pneg %p140
      %p246 = scmp.lt.s32.totalorder %s18, 1
      %s247 = scalar_select %p246, %s18, 1
      %s248 = smul.addr %s247, 8
      %s249 = scalar_lea.vmem %s3, %s248
      %s250 = sadd.s32 %s18, %s19
      %p251 = scmp.lt.s32.totalorder %s250, 0
      %s252 = scalar_select %p251, %s250, 0
      %s253 = smul.u32 2, %s252
      %p254 = scmp.lt.s32.totalorder %s253, 1
      %s255 = scalar_select %p254, %s253, 1
      %s256 = smul.addr %s255, 8
      %s257 = scalar_lea.vmem %s0, %s256
      %s258 = sadd.s32 %s18, %s19
      %p259 = scmp.lt.s32.totalorder %s258, 0
      %s260 = scalar_select %p259, %s258, 0
      %s261 = smul.u32 2, %s260
      %s262 = sadd.s32 %s18, %s19
      %p263 = scmp.lt.s32.totalorder %s262, 0
      %s264 = scalar_select %p263, %s262, 0
      %s265 = smul.u32 2, %s264
      %p266 = scmp.lt.s32.totalorder %s265, 1
      %s267 = scalar_select %p266, %s265, 1
      %s268 = smul.addr %s267, 8
      %s269 = scalar_lea.vmem %s1, %s268
      %s270 = sadd.s32 %s18, %s19
      %p271 = scmp.lt.s32.totalorder %s270, 0
      %s272 = scalar_select %p271, %s270, 0
      %s273 = smul.u32 2, %s272
      %s274 = sadd.s32 %s18, %s19
      %p275 = scmp.lt.s32.totalorder %s274, 0
      %s276 = scalar_select %p275, %s274, 0
      %s277 = smul.u32 2, %s276
      %p278 = scmp.lt.s32.totalorder %s277, 1
      %s279 = scalar_select %p278, %s277, 1
      %s280 = smul.addr %s279, 8
      %s281 = scalar_lea.vmem %s2, %s280
      %s282 = sadd.s32 %s18, %s19
      %p283 = scmp.lt.s32.totalorder %s282, 0
      %s284 = scalar_select %p283, %s282, 0
      %s285 = smul.u32 2, %s284
      %p286 = scmp.lt.s32.totalorder %s18, 1
      %s287 = scalar_select %p286, %s18, 1
      %s288 = smul.addr %s287, 8
      %s289 = scalar_lea.vmem %s3, %s288
      %p290 = scmp.eq.s32.totalorder %s19, 0
      // Predicated region
      $region33: #{_masked_loss_sums.1} parent=31 // pred_check
        %p291 = pneg %p290
      $region34: #{_masked_loss_sums.1} parent=31 // pred_check_branch
        %293 = sbr.rel (%p291) target = $region36
      $region35: #{_masked_loss_sums.1} parent=31 // pred_region
        %vm294 = vcmask 7168
        %295 = vst.msk [vmem:[#allocation2] sm:$0xff] %vm294, 0.0
        %296 = vst.msk [vmem:[#allocation2 + $0x8] sm:$0xff] %vm294, 0.0
        %297 = vst.msk [vmem:[#allocation3] sm:$0xff] %vm294, 0.0
        %298 = vst.msk [vmem:[#allocation3 + $0x8] sm:$0xff] %vm294, 0.0
        %299 = vst.msk [vmem:[#allocation4] sm:$0xff] %vm294, 0.0
        %300 = vst.msk [vmem:[#allocation4 + $0x8] sm:$0xff] %vm294, 0.0
      $region36: #{_masked_loss_sums.1} parent=31 // pred_fallthru
        _
      %v301 = vld [vmem:[%s257] sm:$0xff]
      %v302 = vld [vmem:[%s257 + $0x8] sm:$0xff]
      %s303 = sadd.s32 %s18, %s19
      %v304 = vlaneseq
      %v305 = vshrl.u32 %v304, 7
      %v306 = vadd.s32 %v305, 8
      %s307 = smul.u32 %s303, 16
      %v308 = vstv %s307
      %v309 = vadd.s32 %v308, %v305
      %v310 = vadd.s32 %v308, %v306
      %vm311 = vcmp.lt.s32.totalorder %v309, 16
      %vm312 = vcmp.lt.s32.totalorder %v310, 16
      %vm313 = vcmask 130048
      %v314 = vsel %vm313, %v301, -inf
      %315 = vmax.xlane.f32.xlu0 %v314
      %v316 = vpop.xlane.xlu0 %315
      %v317 = vsel %vm313, %v302, -inf
      %318 = vmax.xlane.f32.xlu0 %v317
      %v319 = vpop.xlane.xlu0 %318
      %v320 = vsub.f32 %v301, %v316
      %v321 = vsub.f32 %v302, %v319
      %v322 = vmul.f32 %v320, 1.442695
      %v323 = vpow.pop %v322
      %v324 = vmul.f32 %v321, 1.442695
      %v325 = vpow.pop %v324
      %v326 = vsel %vm313, %v323, 0.0
      %327 = vadd.xlane.f32.xlu0 %v326
      %v328 = vpop.xlane.xlu0 %327
      %v329 = vsel %vm313, %v325, 0.0
      %330 = vadd.xlane.f32.xlu0 %v329
      %v331 = vpop.xlane.xlu0 %330
      %v332 = vlog2.pop %v328
      %v333 = vmul.f32 %v332, 0.6931472
      %v334 = vlog2.pop %v331
      %v335 = vmul.f32 %v334, 0.6931472
      %v336 = vlaneseq
      %v337 = vand.u32 %v336, 127
      %v338 = vld [vmem:[%s269] sm:$0xff]
      %v339 = vld [vmem:[%s269 + $0x8] sm:$0xff]
      %340 = vset.pattern.permute.xlu0 0
      %341 = vperm.xlu0 %340, %v338
      %v342 = vpop.permute.xlu0 %341
      %343 = vset.pattern.permute.xlu0 0
      %344 = vperm.xlu0 %343, %v339
      %v345 = vpop.permute.xlu0 %344
      %vm346 = vcmp.eq.s32.totalorder %v337, %v342
      %vm347 = vcmp.eq.s32.totalorder %v337, %v345
      %v348 = vsel %vm346, %v301, 0.0
      %v349 = vsel %vm347, %v302, 0.0
      %v350 = vsel %vm313, %v348, 0.0
      %351 = vadd.xlane.f32.xlu0 %v350
      %v352 = vpop.xlane.xlu0 %351
      %v353 = vsel %vm313, %v349, 0.0
      %354 = vadd.xlane.f32.xlu0 %v353
      %v355 = vpop.xlane.xlu0 %354
      %v356 = vsub.f32 %v352, %v316
      %v357 = vsub.f32 %v355, %v319
      %v358 = vsub.f32 %v356, %v333
      %v359 = vsub.f32 %v357, %v335
      %v360 = vld [vmem:[%s281] sm:$0xff]
      %v361 = vld [vmem:[%s281 + $0x8] sm:$0xff]
      %v362 = vsub.f32 0.0, %v358
      %v363 = vsub.f32 0.0, %v359
      %v364 = vmul.f32 %v358, 1.442695
      %v365 = vpow.pop %v364
      %v366 = vmul.f32 %v359, 1.442695
      %v367 = vpow.pop %v366
      %v368 = vsub.f32 1.0, %v365
      %v369 = vsub.f32 1.0, %v367
      %v370 = vmul.f32 %v368, %v368
      %v371 = vmul.f32 %v369, %v369
      %v372 = vmul.f32 %v370, %v362
      %v373 = vmul.f32 %v371, %v363
      %v374 = vld [vmem:[#allocation2] sm:$0xff]
      %v375 = vld [vmem:[#allocation2 + $0x8] sm:$0xff]
      %v376 = vmul.f32 %v362, %v360
      %v377 = vmul.f32 %v363, %v361
      %v378 = vsel %vm311, %v376, 0.0
      %v379 = vsel %vm312, %v377, 0.0
      %v380 = vadd.f32 %v374, %v378
      %v381 = vadd.f32 %v375, %v379
      %vm382 = vcmask 7168
      %383 = vst.msk [vmem:[#allocation2] sm:$0xff] %vm382, %v380
      %384 = vst.msk [vmem:[#allocation2 + $0x8] sm:$0xff] %vm382, %v381
      %v385 = vld [vmem:[#allocation3] sm:$0xff]
      %v386 = vld [vmem:[#allocation3 + $0x8] sm:$0xff]
      %v387 = vmul.f32 %v372, %v360
      %v388 = vmul.f32 %v373, %v361
      %v389 = vsel %vm311, %v387, 0.0
      %v390 = vsel %vm312, %v388, 0.0
      %v391 = vadd.f32 %v385, %v389
      %v392 = vadd.f32 %v386, %v390
      %393 = vst.msk [vmem:[#allocation3] sm:$0xff] %vm382, %v391
      %394 = vst.msk [vmem:[#allocation3 + $0x8] sm:$0xff] %vm382, %v392
      %v395 = vld [vmem:[#allocation4] sm:$0xff]
      %v396 = vld [vmem:[#allocation4 + $0x8] sm:$0xff]
      %v397 = vsel %vm311, %v360, 0.0
      %v398 = vsel %vm312, %v361, 0.0
      %v399 = vadd.f32 %v395, %v397
      %v400 = vadd.f32 %v396, %v398
      %401 = vst.msk [vmem:[#allocation4] sm:$0xff] %vm382, %v399
      %402 = vst.msk [vmem:[#allocation4 + $0x8] sm:$0xff] %vm382, %v400
      // Predicated region
      $region37: #{_masked_loss_sums.1} parent=31 // pred_check
        %p403 = pneg %p290
      $region38: #{_masked_loss_sums.1} parent=31 // pred_check_branch
        %405 = sbr.rel (%p403) target = $region40
      $region39: #{_masked_loss_sums.1} parent=31 // pred_region
        %v406 = vld [vmem:[#allocation2] sm:$0xff]
        %v407 = vld [vmem:[#allocation2 + $0x8] sm:$0xff]
        %v408 = vsel %vm382, %v406, 0.0
        %v409 = vsel %vm382, %v407, 0.0
        %v410 = vadd.f32 %v408, %v409
        %411 = vadd.xlane.f32.xlu0 %v410
        %v412 = vpop.xlane.xlu0 %411
        %v413 = vrot.slane %v412, 4
        %v414 = vadd.f32 %v412, %v413
        %v415 = vrot.slane %v414, 2
        %v416 = vadd.f32 %v414, %v415
        %v417 = vrot.slane %v416, 1
        %v418 = vadd.f32 %v416, %v417
        %s419 = vtos %v418
        %v420 = vld [vmem:[#allocation3] sm:$0xff]
        %v421 = vld [vmem:[#allocation3 + $0x8] sm:$0xff]
        %v422 = vsel %vm382, %v420, 0.0
        %v423 = vsel %vm382, %v421, 0.0
        %v424 = vadd.f32 %v422, %v423
        %425 = vadd.xlane.f32.xlu0 %v424
        %v426 = vpop.xlane.xlu0 %425
        %v427 = vrot.slane %v426, 4
        %v428 = vadd.f32 %v426, %v427
        %v429 = vrot.slane %v428, 2
        %v430 = vadd.f32 %v428, %v429
        %v431 = vrot.slane %v430, 1
        %v432 = vadd.f32 %v430, %v431
        %s433 = vtos %v432
        %v434 = vld [vmem:[#allocation4] sm:$0xff]
        %v435 = vld [vmem:[#allocation4 + $0x8] sm:$0xff]
        %v436 = vsel %vm382, %v434, 0.0
        %v437 = vsel %vm382, %v435, 0.0
        %v438 = vadd.f32 %v436, %v437
        %439 = vadd.xlane.f32.xlu0 %v438
        %v440 = vpop.xlane.xlu0 %439
        %v441 = vrot.slane %v440, 4
        %v442 = vadd.f32 %v440, %v441
        %v443 = vrot.slane %v442, 2
        %v444 = vadd.f32 %v442, %v443
        %v445 = vrot.slane %v444, 1
        %v446 = vadd.f32 %v444, %v445
        %s447 = vtos %v446
        %vm448 = vcmp.eq.s32.totalorder %v305, 0
        %vm449 = vcmp.eq.s32.totalorder %v337, 0
        %vm450 = vmand %vm448, %vm449
        %vm451 = vcmp.eq.s32.totalorder %v337, 1
        %vm452 = vmand %vm448, %vm451
        %vm453 = vcmp.eq.s32.totalorder %v337, 2
        %vm454 = vmand %vm448, %vm453
        %v455 = vstv %s447
        %v456 = vsel %vm454, %v455, 0.0
        %v457 = vstv %s433
        %v458 = vsel %vm452, %v457, %v456
        %v459 = vstv %s419
        %v460 = vsel %vm450, %v459, %v458
        %461 = vst [vmem:[%s289] sm:$0xff] %v460
      $region40: #{_masked_loss_sums.1} parent=31 // pred_fallthru
        _
      %p462 = scmp.lt.s32.totalorder %s18, 1
      %s463 = scalar_select %p462, %s18, 1
      %s464 = smul.addr %s463, 8
      %s465 = scalar_lea.vmem %s3, %s464
      // Predicated region
      $region41: #{_masked_loss_sums.1} parent=31 // pred_check
        %p466 = pneg %p140
      $region42: #{_masked_loss_sums.1} parent=31 // pred_check_branch
        %468 = sbr.rel (%p466) target = $region44
      $region43: #{_masked_loss_sums.1} parent=31 // pred_region
        _
      $region44: #{_masked_loss_sums.1} parent=31 // pred_fallthru
        _
    $region32: #{_masked_loss_sums.1} parent=5 // pred_fallthru
      _
    %p469 = scmp.le.s32.totalorder 2, %s9
    // Predicated region
    $region45: #{_masked_loss_sums.1} parent=5 // pred_check
      %p470 = pneg %p469
    $region46: #{_masked_loss_sums.1} parent=5 // pred_check_branch
      %472 = sbr.rel (%p470) target = $region48
    $region47: #{_masked_loss_sums.1} parent=5 // pred_region
      %s473 = ssub.s32 %s9, 2
      // Predicated region
      $region49: #{_masked_loss_sums.1} parent=47 // pred_check
        %p474 = pneg %p146
      $region50: #{_masked_loss_sums.1} parent=47 // pred_check_branch
        %476 = sbr.rel (%p474) target = $region52
      $region51: #{_masked_loss_sums.1} parent=47 // pred_region
        %p477 = scmp.lt.s32.totalorder %s20, 1
        %s478 = scalar_select %p477, %s20, 1
        %s479 = smul.addr %s478, 8
        %s480 = scalar_lea.vmem %s3, %s479
      $region52: #{_masked_loss_sums.1} parent=47 // pred_fallthru
        _
    $region48: #{_masked_loss_sums.1} parent=5 // pred_fallthru
      _
  $region6: #{_masked_loss_sums.1} parent=0 // loop_footer
    %s13 = sadd.s32 1, %s9
  $region7: #{_masked_loss_sums.1} parent=0 // loop_footer_branch
    %8 = sbr.rel target = $region3
  $region8: #{_masked_loss_sums.1} parent=0 // loop_exit
    _

</llo_original>
